<compile_context>
chip_gen: v5e
topology: v5e:2x2
jax: 0.10.0
libtpu: 0.0.40
codegen_flags: <defaults>
</compile_context>

<pallas_src>
import math

import jax
import jax.numpy as jnp
from jax.experimental import pallas as pl
from jax.experimental.pallas import tpu as pltpu


def build_pe_table(d_model: int, max_len: int = 5000, dtype=jnp.float32):
    """Deterministic sinusoidal PE table, identical to the PyTorch __init__."""
    position = jnp.arange(0, max_len, dtype=jnp.float32)[:, None]            # (L, 1)
    div_term = jnp.exp(jnp.arange(0, d_model, 2, dtype=jnp.float32)
                       * (-math.log(10000.0) / d_model))                     # (D/2,)
    ang = position * div_term                                                # (L, D/2)
    # pe[:, 0::2] = sin, pe[:, 1::2] = cos  -> interleave along last dim
    pe = jnp.stack([jnp.sin(ang), jnp.cos(ang)], axis=-1).reshape(max_len, d_model)
    return pe.astype(dtype)


# ---------------- kernels (pure elementwise on lane-dense 2-D blocks) ----------------

def _pe_add_kernel(x_ref, pe_ref, o_ref):
    # x_ref: (TB, TM), pe_ref: (1, TM) -> broadcast over the batch-row sublanes.
    o_ref[...] = (x_ref[...] + pe_ref[...]).astype(o_ref.dtype)


def _pe_add_dropout_kernel(x_ref, pe_ref, mask_ref, o_ref):
    # mask_ref already holds keep/(1-p) in x.dtype -> single fused add+mul.
    o_ref[...] = ((x_ref[...] + pe_ref[...]) * mask_ref[...]).astype(o_ref.dtype)


# ---------------- wrapper ----------------

_LANE = 128
_SUBLANE = 8
_MAX_LANE_TILE = 32768   # elems along flattened (S*D) axis per block
_MAX_ROW_TILE = 8        # batch rows per block


def _pick_tile(dim: int, max_tile: int, align: int) -> int:
    if dim <= max_tile:
        return dim                                # full extent: always legal
    return max(align, (max_tile // align) * align)  # largest aligned tile <= max


def positional_encoding_forward(x, pe_table, *, p_drop=0.1, training=False, rng_key=None):
    """x: (B, S, D). pe_table: (max_len, D). Returns (B, S, D)."""
    B, S, D = x.shape
    M = S * D

    x2 = x.reshape(B, M)                                        # contiguous, free reshape
    pe2 = pe_table[:S].astype(x.dtype).reshape(1, M)            # cast once in the wrapper

    TB = _pick_tile(B, _MAX_ROW_TILE, _SUBLANE)
    TM = _pick_tile(M, _MAX_LANE_TILE, _LANE)
    grid = (pl.cdiv(B, TB), pl.cdiv(M, TM))

    x_spec = pl.BlockSpec((TB, TM), lambda i, j: (i, j))
    pe_spec = pl.BlockSpec((1, TM), lambda i, j: (0, j))
    out_spec = pl.BlockSpec((TB, TM), lambda i, j: (i, j))

    use_dropout = bool(training) and float(p_drop) > 0.0
    if use_dropout:
        if rng_key is None:
            rng_key = jax.random.PRNGKey(0)
        keep = jax.random.bernoulli(rng_key, 1.0 - p_drop, shape=(B, M))
        scale = jnp.asarray(1.0 / (1.0 - p_drop), dtype=x.dtype)
        mask = keep.astype(x.dtype) * scale                     # inverted-dropout mask
        kernel = _pe_add_dropout_kernel
        in_specs = [x_spec, pe_spec, pl.BlockSpec((TB, TM), lambda i, j: (i, j))]
        operands = (x2, pe2, mask)
    else:
        kernel = _pe_add_kernel
        in_specs = [x_spec, pe_spec]
        operands = (x2, pe2)

    out2 = pl.pallas_call(
        kernel,
        out_shape=jax.ShapeDtypeStruct((B, M), x.dtype),
        grid_spec=pltpu.PrefetchScalarGridSpec(
            num_scalar_prefetch=0,
            grid=grid,
            in_specs=in_specs,
            out_specs=out_spec,
        ),
        compiler_params=pltpu.CompilerParams(
            # No cross-iteration state (mask is precomputed), so both axes can be
            # sharded across TensorCores on v7x; harmless on single-TC v5e/v6e.
            dimension_semantics=("parallel", "parallel"),
            vmem_limit_bytes=32 * 1024 * 1024,
        ),
    )(*operands)

    return out2.reshape(B, S, D)


if __name__ == "__main__":
    B, S, D = 2, 8, 32
    max_len = 64
    key = jax.random.PRNGKey(0)
    x = jax.random.normal(key, (B, S, D), dtype=jnp.float32)

    pe_table = build_pe_table(D, max_len=max_len)

    # Eval mode (dropout = identity): check exact semantics against pure-JAX reference.
    out_eval = jax.block_until_ready(
        positional_encoding_forward(x, pe_table, p_drop=0.1, training=False))
    ref = x + pe_table[None, :S, :]
    assert out_eval.shape == (B, S, D)
    assert jnp.allclose(out_eval, ref, atol=1e-6), "eval-mode mismatch"

    # Training mode: every output element must be either 0 (dropped) or (x+pe)/(1-p) (kept).
    drop_key = jax.random.PRNGKey(123)
    out_train = jax.block_until_ready(
        positional_encoding_forward(x, pe_table, p_drop=0.1, training=True, rng_key=drop_key))
    assert out_train.shape == (B, S, D)
    scaled = ref / (1.0 - 0.1)
    is_zero = jnp.isclose(out_train, 0.0, atol=1e-6)
    is_kept = jnp.isclose(out_train, scaled, atol=1e-5)
    assert bool(jnp.all(is_zero | is_kept)), "train-mode dropout mismatch"

    print("KERNEL_OK")
</pallas_src>

<mosaic_0001>
module attributes {stable_mosaic.version = 11 : i64} {
  func.func @_pe_add_kernel(%arg0: i32, %arg1: i32, %arg2: memref<2x256xf32, #tpu.memory_space<vmem>>, %arg3: memref<1x256xf32, #tpu.memory_space<vmem>>, %arg4: memref<2x256xf32, #tpu.memory_space<vmem>>) attributes {dimension_semantics = [#tpu.dimension_semantics<parallel>, #tpu.dimension_semantics<parallel>], iteration_bounds = array<i64: 1, 1>, scalar_prefetch = 0 : i64, scratch_operands = 0 : i64, tpu.core_type = #tpu.core_type<tc>, window_params = [{transform_indices = @transform_0, window_bounds = array<i64: 2, 256>}, {transform_indices = @transform_1, window_bounds = array<i64: 1, 256>}, {transform_indices = @transform_2, window_bounds = array<i64: 2, 256>}]} {
    %c0 = arith.constant 0 : index
    %c0_0 = arith.constant 0 : index
    %0 = vector.load %arg2[%c0, %c0_0] : memref<2x256xf32, #tpu.memory_space<vmem>>, vector<2x256xf32>
    %c0_1 = arith.constant 0 : index
    %c0_2 = arith.constant 0 : index
    %1 = vector.load %arg3[%c0_1, %c0_2] : memref<1x256xf32, #tpu.memory_space<vmem>>, vector<1x256xf32>
    %2 = vector.broadcast %1 : vector<1x256xf32> to vector<2x256xf32>
    %3 = arith.addf %0, %2 : vector<2x256xf32>
    %c0_3 = arith.constant 0 : index
    %c0_4 = arith.constant 0 : index
    %4 = vector.load %arg4[%c0_3, %c0_4] : memref<2x256xf32, #tpu.memory_space<vmem>>, vector<2x256xf32>
    tpu.vector_store %arg4[%c0_3, %c0_4], %3 {strides = array<i32>} : memref<2x256xf32, #tpu.memory_space<vmem>>, vector<2x256xf32>,
    return
  }
  func.func @transform_0(%arg0: i32, %arg1: i32) -> (i32, i32) {
    %c0_i32 = arith.constant 0 : i32
    return %arg0, %arg1 : i32, i32
  }
  func.func @transform_1(%arg0: i32, %arg1: i32) -> (i32, i32) {
    %c0_i32 = arith.constant 0 : i32
    %c0_i32_0 = arith.constant 0 : i32
    return %c0_i32, %arg1 : i32, i32
  }
  func.func @transform_2(%arg0: i32, %arg1: i32) -> (i32, i32) {
    %c0_i32 = arith.constant 0 : i32
    return %arg0, %arg1 : i32, i32
  }
}

</mosaic_0001>

<llo_original>
// kernel: tpu_custom_call.1
$region0: #{tpu_custom_call.1}
  #allocation0 [shape = 'u32[]', space=smem, size = 0x4, offset = 0x4, fixed_abs, tag = 'smem constant byte address 0x4 - core index']
  #allocation1 [shape = 'u32[72,128]{1,0:T(1,128)}', space=vmem, size = 0x9000, scoped, tag = 'internal scratch']
  %s0 = inlined_call_operand.hbm [shape: f32[2,256], index: 0, kind: input, shape index: {}]
  %s1 = inlined_call_operand.hbm [shape: f32[1,256], index: 1, kind: input, shape index: {}]
  %s2 = inlined_call_operand.hbm [shape: f32[2,256], index: 2, kind: output, shape index: {}]
  %s3 = sld [smem:[#allocation0]]
  $region26: #{tpu_custom_call.1} parent=0
    _
  %s5 = ssub.s32 1, %s3
  %s6 = scalar_select 0, %s5, %s3
  $region1: #{tpu_custom_call.1} parent=0
    #allocation2 [shape = 'u8[2048]{0}', space=vmem, size = 0x800, scoped, tag = 'input window, operand 0, single buffered']
    #allocation3 [shape = 's32[1]{0}', space=sflag, size = 0x4, scoped, tag = 'scoped memory for tpu_custom_call.1']
    #allocation4 [shape = 's32[1]{0}', space=sflag, size = 0x4, scoped, tag = 'scoped memory for tpu_custom_call.1']
    #allocation5 [shape = 'u8[1024]{0}', space=vmem, size = 0x400, scoped, tag = 'input window, operand 1, single buffered']
    #allocation6 [shape = 's32[1]{0}', space=sflag, size = 0x4, scoped, tag = 'scoped memory for tpu_custom_call.1']
    #allocation7 [shape = 'u8[2048]{0}', space=vmem, size = 0x800, scoped, tag = 'output window, operand 0, single buffered']
    %7 = vsyncpa [#allocation3], 0
    %8 = vsyncpa [#allocation6], 0
    %9 = vsyncpa [#allocation4], 0
    // Predicated region
    $region2: #{tpu_custom_call.1} parent=1 // pred_check
      _
    $region3: #{tpu_custom_call.1} parent=1 // pred_check_branch
      %11 = sbr.rel (0) target = $region5
    $region4: #{tpu_custom_call.1} parent=1 // pred_region
      %13 = vsyncadd [#allocation3], 0
      %s15 = sshll.u32 %s0, 4
      %s16 = int_to_ptr.hbm [resolvable:$true] %s15
      %s17 = sshll.u32 [#allocation2], 4
      %s18 = int_to_ptr.vmem [resolvable:$true] %s17
      %20 = dma.hbm_to_vmem [thread:$0]  %s16, 64, %s18, [#allocation3]
    $region5: #{tpu_custom_call.1} parent=1 // pred_fallthru
      _
    // Predicated region
    $region6: #{tpu_custom_call.1} parent=1 // pred_check
      _
    $region7: #{tpu_custom_call.1} parent=1 // pred_check_branch
      %22 = sbr.rel (0) target = $region9
    $region8: #{tpu_custom_call.1} parent=1 // pred_region
      %24 = vsyncadd [#allocation6], 0
      %s26 = sshll.u32 %s1, 4
      %s27 = int_to_ptr.hbm [resolvable:$true] %s26
      %s28 = sshll.u32 [#allocation5], 4
      %s29 = int_to_ptr.vmem [resolvable:$true] %s28
      %31 = dma.hbm_to_vmem [thread:$0]  %s27, 32, %s29, [#allocation6]
    $region9: #{tpu_custom_call.1} parent=1 // pred_fallthru
      _
    // Predicated region
    $region10: #{tpu_custom_call.1} parent=1 // pred_check
      _
    $region11: #{tpu_custom_call.1} parent=1 // pred_check_branch
      %33 = sbr.rel (0) target = $region13
    $region12: #{tpu_custom_call.1} parent=1 // pred_region
      %35 = dma.done [#allocation3], 64
    $region13: #{tpu_custom_call.1} parent=1 // pred_fallthru
      _
    // Predicated region
    $region14: #{tpu_custom_call.1} parent=1 // pred_check
      _
    $region15: #{tpu_custom_call.1} parent=1 // pred_check_branch
      %37 = sbr.rel (0) target = $region17
    $region16: #{tpu_custom_call.1} parent=1 // pred_region
      %39 = dma.done [#allocation6], 32
    $region17: #{tpu_custom_call.1} parent=1 // pred_fallthru
      _
    %v40 = vld [vmem:[#allocation2] sm:$0xf]
    %v41 = vld [vmem:[#allocation5] sm:$0x3]
    %v43 = vperm.slane %v41, 0
    %v44 = vperm.slane %v41, 1
    %v45 = vrot.slane %v44, 6
    %vm46 = vcmask 1041408
    %v47 = vsel %vm46, %v43, %v45
    %v49 = vadd.f32 %v40, %v47
    %50 = vst [vmem:[#allocation7] sm:$0xf] %v49
    // Predicated region
    $region18: #{tpu_custom_call.1} parent=1 // pred_check
      _
    $region19: #{tpu_custom_call.1} parent=1 // pred_check_branch
      %52 = sbr.rel (0) target = $region21
    $region20: #{tpu_custom_call.1} parent=1 // pred_region
      %54 = vsyncadd [#allocation4], 0
      %s56 = sshll.u32 [#allocation7], 4
      %s57 = int_to_ptr.vmem [resolvable:$true] %s56
      %s58 = sshll.u32 %s2, 4
      %s59 = int_to_ptr.hbm [resolvable:$true] %s58
      %61 = dma.vmem_to_hbm [thread:$0]  %s57, 64, %s59, [#allocation4]
    $region21: #{tpu_custom_call.1} parent=1 // pred_fallthru
      _
    // Predicated region
    $region22: #{tpu_custom_call.1} parent=1 // pred_check
      _
    $region23: #{tpu_custom_call.1} parent=1 // pred_check_branch
      %63 = sbr.rel (0) target = $region25
    $region24: #{tpu_custom_call.1} parent=1 // pred_region
      %65 = dma.done [#allocation4], 64
    $region25: #{tpu_custom_call.1} parent=1 // pred_fallthru
      _
    %66 = vsyncpa [#allocation3], 1
    %67 = vsyncpa [#allocation6], 1
    %68 = vsyncpa [#allocation4], 1

</llo_original>
